<compile_context>
chip_gen: v7x
topology: tpu7x:2x2x1
jax: 0.10.0
libtpu: 0.0.40
codegen_flags: <defaults>
</compile_context>

<pallas_src>
import functools

import numpy as np
import jax
import jax.numpy as jnp
from jax.experimental import pallas as pl
from jax.experimental.pallas import tpu as pltpu


def _round_up(x, m):
    return (x + m - 1) // m * m


def _vmem_budgets():
    """Generation-aware (per-step block budget, scoped vmem limit) in bytes."""
    try:
        cap = int(pltpu.get_tpu_info().vmem_capacity_bytes)
    except Exception:  # conservative default if the query is unavailable
        cap = 64 * 1024 * 1024
    if cap >= 100 * 1024 * 1024:      # v5e / v6e class parts (128 MiB per core)
        return 52 * 1024 * 1024, 98 * 1024 * 1024
    return 24 * 1024 * 1024, 42 * 1024 * 1024   # v7x class (64 MiB per core)


def _build_taps(kernel_np, structuring_element, max_val, prune_inactive_taps):
    """(i, j, offset) taps.  kernel==0 positions carry a -max_val offset; with
    pruning enabled they are dropped (cannot win the min for images whose
    dynamic range is well below max_val, the documented contract of `kernel`)."""
    se_h, se_w = kernel_np.shape
    if structuring_element is None:
        nb = np.zeros_like(kernel_np)
    else:
        nb = np.asarray(structuring_element, dtype=np.float32).copy()
    nb[kernel_np == 0] = -max_val
    taps = [(i, j, float(nb[i, j]))
            for i in range(se_h) for j in range(se_w)
            if not (prune_inactive_taps and kernel_np[i, j] == 0)]
    if not taps:  # degenerate all-zero kernel: keep exact reference behaviour
        taps = [(i, j, float(nb[i, j]))
                for i in range(se_h) for j in range(se_w)]
    return tuple(taps)


# ---------------------------------------------------------------------------
# Native NCHW layout kernel (default): block (G, TH, W), W on lanes.
# ---------------------------------------------------------------------------
def _erosion_nchw_kernel(*refs, th, w, pad_top, pad_bottom, pad_left, lpad,
                         pad_val, taps, has_top, has_bot):
    """refs = x_ref[, top_halo_ref][, bot_halo_ref], out_ref, pad_ref(scratch).

    pad_ref: (G, th+pad_top+pad_bottom, lpad+W+pad_right) f32 scratch.  The image
    block lives at rows [pad_top, pad_top+th) and lanes [lpad, lpad+W), so every
    scratch store is lane-tile aligned; only tap reads use lane offsets.
    """
    it = iter(refs)
    x_ref = next(it)
    top_ref = next(it) if has_top else None
    bot_ref = next(it) if has_bot else None
    out_ref = next(it)
    pad_ref = next(it)

    cdt = pad_ref.dtype
    thp = th + pad_top + pad_bottom

    # Border value everywhere (aligned full store), then image / halo rows.
    # TODO(synk): the full refill each step costs one extra VMEM store pass; a
    # ring-only refill would help v5e's single store slot.
    pad_ref[...] = jnp.full(pad_ref.shape, pad_val, dtype=cdt)
    pad_ref[:, pad_top:pad_top + th, lpad:lpad + w] = x_ref[...].astype(cdt)
    if has_top:
        pad_ref[:, 0:pad_top, lpad:lpad + w] = (
            jnp.squeeze(top_ref[...], axis=1).astype(cdt))
    if has_bot:
        pad_ref[:, pad_top + th:thp, lpad:lpad + w] = (
            jnp.squeeze(bot_ref[...], axis=1).astype(cdt))

    # Static unroll over active SE taps: row offsets are sublane slices, column
    # offsets are static lane-offset reads (XLU shifts -- idle unit here).
    ero = None
    for (i, j, off) in taps:
        c0 = lpad - pad_left + j
        cand = pad_ref[:, i:i + th, c0:c0 + w]
        if off != 0.0:
            cand = cand - jnp.asarray(off, dtype=cdt)
        ero = cand if ero is None else jnp.minimum(ero, cand)
    out_ref[...] = ero.astype(out_ref.dtype)


def _plan_nchw_blocks(N, H, W, pad_top, pad_bottom, pad_left, pad_right,
                      itemsize, budget, rows_per_block, channels_per_block):
    lpad = _round_up(pad_left, 128) if pad_left > 0 else 0
    lane_w = _round_up(W, 128)
    lane_wp = _round_up(lpad + W + pad_right, 128)

    def block_bytes(gn, th):
        thp = th + pad_top + pad_bottom
        io = 4 * gn * _round_up(th, 8) * lane_w * itemsize           # dbl-buffered in+out
        scr = gn * _round_up(thp, 8) * lane_wp * 4                   # f32 scratch
        halo = 4 * gn * _round_up(max(pad_top, pad_bottom, 1), 8) * lane_w * itemsize
        return io + scr + halo

    if rows_per_block is not None:
        th = int(rows_per_block)
        if th != H and (th % 8 != 0 or H % th != 0):
            raise ValueError("rows_per_block must equal H or be a multiple of 8 "
                             "that divides H")
    else:
        candidates = [H] + [t for t in range(_round_up(H, 8) - 8, 7, -8)
                            if t < H and H % t == 0]
        th = None
        for t in candidates:
            if block_bytes(1, t) <= budget:
                th = t
                break
        if th is None:
            # TODO(synk): add W tiling for images too wide for a single row-set block.
            th = candidates[-1]

    n_h = H // th if th < H else 1

    if channels_per_block is not None:
        gn = max(1, min(int(channels_per_block), N))
    else:
        gn = int(max(1, min(N, budget // max(block_bytes(1, th), 1))))
        # Target >= 4 grid steps so double-buffering has iterations to overlap
        # (v7x can also spread them across both TensorCores).
        while gn > 1 and pl.cdiv(N, gn) * n_h < 4:
            gn = max(1, (gn + 1) // 2)
    return gn, th, n_h, lpad


def _erosion_nchw(x3, pad_top, pad_bottom, pad_left, pad_right, pad_val, taps,
                  budget, vmem_limit, cost, rows_per_block, channels_per_block):
    N, H, W = x3.shape
    itemsize = jnp.dtype(x3.dtype).itemsize
    gn, th, n_h, lpad = _plan_nchw_blocks(
        N, H, W, pad_top, pad_bottom, pad_left, pad_right, itemsize, budget,
        rows_per_block, channels_per_block)
    thp = th + pad_top + pad_bottom
    tiled = th < H
    has_top = tiled and pad_top > 0
    has_bot = tiled and pad_bottom > 0

    inputs = [x3]
    in_specs = [pl.BlockSpec((gn, th, W), lambda n, h: (n, h, 0))]
    if tiled:
        # Slim halo arrays: (se_h-1) rows per tile, built once in the wrapper.
        xr = x3.reshape(N, n_h, th, W)
        if has_top:
            pad_rows = jnp.full((N, 1, pad_top, W), pad_val, dtype=x3.dtype)
            top = jnp.concatenate(
                [pad_rows, xr[:, :n_h - 1, th - pad_top:, :]], axis=1)
            inputs.append(top)
            in_specs.append(
                pl.BlockSpec((gn, 1, pad_top, W), lambda n, h: (n, h, 0, 0)))
        if has_bot:
            pad_rows = jnp.full((N, 1, pad_bottom, W), pad_val, dtype=x3.dtype)
            bot = jnp.concatenate(
                [xr[:, 1:, :pad_bottom, :], pad_rows], axis=1)
            inputs.append(bot)
            in_specs.append(
                pl.BlockSpec((gn, 1, pad_bottom, W), lambda n, h: (n, h, 0, 0)))

    kern = functools.partial(
        _erosion_nchw_kernel, th=th, w=W, pad_top=pad_top, pad_bottom=pad_bottom,
        pad_left=pad_left, lpad=lpad, pad_val=pad_val, taps=taps,
        has_top=has_top, has_bot=has_bot)

    return pl.pallas_call(
        kern,
        out_shape=jax.ShapeDtypeStruct((N, H, W), x3.dtype),
        grid=(pl.cdiv(N, gn), n_h),
        in_specs=in_specs,
        out_specs=pl.BlockSpec((gn, th, W), lambda n, h: (n, h, 0)),
        scratch_shapes=[pltpu.VMEM((gn, thp, lpad + W + pad_right), jnp.float32)],
        compiler_params=pltpu.CompilerParams(
            dimension_semantics=("parallel", "parallel"),
            vmem_limit_bytes=vmem_limit),
        cost_estimate=cost,
    )(*inputs)


# ---------------------------------------------------------------------------
# Channels-last layout kernel: kept for small-W / many-channel inputs.
# ---------------------------------------------------------------------------
def _erosion_cl_kernel(x_ref, out_ref, pad_ref, *, H, W, pad_top, pad_left,
                       pad_val, taps):
    Hp, Wp, _ = pad_ref.shape
    pad_bottom = Hp - pad_top - H
    pad_right = Wp - pad_left - W

    def _fill(shape):
        return jnp.full(shape, pad_val, dtype=pad_ref.dtype)

    if pad_top:
        pad_ref[0:pad_top, :, :] = _fill((pad_top,) + pad_ref.shape[1:])
    if pad_bottom:
        pad_ref[pad_top + H:Hp, :, :] = _fill((pad_bottom,) + pad_ref.shape[1:])
    if pad_left:
        pad_ref[:, 0:pad_left, :] = _fill((Hp, pad_left, pad_ref.shape[2]))
    if pad_right:
        pad_ref[:, pad_left + W:Wp, :] = _fill((Hp, pad_right, pad_ref.shape[2]))
    pad_ref[pad_top:pad_top + H, pad_left:pad_left + W, :] = (
        x_ref[...].astype(pad_ref.dtype))

    ero = None
    for (i, j, off) in taps:
        cand = pad_ref[i:i + H, j:j + W, :]
        if off != 0.0:
            cand = cand - jnp.float32(off)
        ero = cand if ero is None else jnp.minimum(ero, cand)
    out_ref[...] = ero.astype(out_ref.dtype)


def _choose_channel_block_cl(N, H, W, Hp, Wp, itemsize, budget):
    if N <= 128:
        return N
    per_chan = 4 * H * _round_up(W, 8) * itemsize + Hp * _round_up(Wp, 8) * 4
    g = max(128, min(budget // per_chan, N) // 128 * 128)
    while g > 128 and pl.cdiv(N, g) < 4:
        g = max(128, (g // 2) // 128 * 128)
    return int(min(g, N))


def _erosion_channels_last(x3, pad_top, pad_bottom, pad_left, pad_right, pad_val,
                           taps, budget, vmem_limit, cost, channels_per_block):
    # TODO(synk): this path has no H tiling; it is only selected for small-W
    # (hence small-plane) images with a lane-dense channel axis.
    N, H, W = x3.shape
    Hp = H + pad_top + pad_bottom
    Wp = W + pad_left + pad_right
    itemsize = jnp.dtype(x3.dtype).itemsize
    if channels_per_block is not None:
        G = max(1, min(int(channels_per_block), N))
    else:
        G = _choose_channel_block_cl(N, H, W, Hp, Wp, itemsize, budget)

    xt = jnp.transpose(x3, (1, 2, 0))          # (H, W, N): one extra HBM pass
    kern = functools.partial(_erosion_cl_kernel, H=H, W=W, pad_top=pad_top,
                             pad_left=pad_left, pad_val=pad_val, taps=taps)
    out_t = pl.pallas_call(
        kern,
        out_shape=jax.ShapeDtypeStruct((H, W, N), x3.dtype),
        grid=(pl.cdiv(N, G),),
        in_specs=[pl.BlockSpec((H, W, G), lambda n: (0, 0, n))],
        out_specs=pl.BlockSpec((H, W, G), lambda n: (0, 0, n)),
        scratch_shapes=[pltpu.VMEM((Hp, Wp, G), jnp.float32)],
        compiler_params=pltpu.CompilerParams(
            dimension_semantics=("parallel",),
            vmem_limit_bytes=vmem_limit),
        cost_estimate=cost,
    )(xt)
    return jnp.transpose(out_t, (2, 0, 1))


# ---------------------------------------------------------------------------
# Public entry points
# ---------------------------------------------------------------------------
def erosion_pallas(image, kernel, structuring_element=None, origin=None,
                   border_type="geodesic", border_value=0.0, max_val=10000.0,
                   prune_inactive_taps=True, layout=None, rows_per_block=None,
                   channels_per_block=None):
    """Pallas equivalent of erosion(...); matches both torch engines.

    prune_inactive_taps: drop kernel==0 taps (only differs from the reference
      when image values approach +/- max_val).
    layout: None (auto), "nchw" (native, no HBM transposes) or "channels_last".
    rows_per_block / channels_per_block: tiling overrides (testing / tuning).
    """
    if image.ndim != 4:
        raise ValueError(f"Input size must have 4 dimensions. Got: {image.ndim}")
    kernel_np = np.asarray(kernel, dtype=np.float32)
    if kernel_np.ndim != 2:
        raise ValueError(f"Kernel size must have 2 dimensions. Got: {kernel_np.ndim}")

    B, C, H, W = image.shape
    se_h, se_w = kernel_np.shape
    if origin is None:
        origin = [se_h // 2, se_w // 2]
    pad_top, pad_bottom = int(origin[0]), se_h - int(origin[0]) - 1
    pad_left, pad_right = int(origin[1]), se_w - int(origin[1]) - 1

    if border_type == "geodesic":
        pad_val = float(max_val)
    elif border_type == "constant":
        pad_val = float(border_value)
    else:
        # TODO(synk): reflect/replicate border modes not implemented (module default is geodesic).
        raise NotImplementedError(f"border_type {border_type} not supported")

    taps = _build_taps(kernel_np, structuring_element, max_val, prune_inactive_taps)
    # TODO(synk): for 16-bit inputs with a flat SE the scratch/min chain could stay
    # in the input dtype on v6e/v7x (halves VMEM + VPU work); kept f32 for exactness.

    N = B * C
    budget, vmem_limit = _vmem_budgets()
    itemsize = jnp.dtype(image.dtype).itemsize
    cost = pl.CostEstimate(flops=2 * len(taps) * N * H * W,
                           transcendentals=0,
                           bytes_accessed=2 * N * H * W * itemsize)

    if layout is None:
        # Native NCHW (no HBM transposes) unless W is lane-starved while the
        # folded batch*channel axis is lane-dense.
        layout = "channels_last" if (W < 128 and N >= 128) else "nchw"
    if layout not in ("nchw", "channels_last"):
        raise ValueError(f"unknown layout {layout}")

    x3 = image.reshape(N, H, W)
    if layout == "nchw":
        out3 = _erosion_nchw(x3, pad_top, pad_bottom, pad_left, pad_right,
                             pad_val, taps, budget, vmem_limit, cost,
                             rows_per_block, channels_per_block)
    else:
        out3 = _erosion_channels_last(x3, pad_top, pad_bottom, pad_left,
                                      pad_right, pad_val, taps, budget,
                                      vmem_limit, cost, channels_per_block)
    return out3.reshape(B, C, H, W)


def _reference_erosion(image, kernel_np, structuring_element=None, origin=None,
                       max_val=10000.0):
    """Pure-JAX mirror of the PyTorch unfold-engine erosion semantics."""
    B, C, H, W = image.shape
    k = np.asarray(kernel_np, dtype=np.float32)
    se_h, se_w = k.shape
    if origin is None:
        origin = [se_h // 2, se_w // 2]
    pt, pb = origin[0], se_h - origin[0] - 1
    pleft, pright = origin[1], se_w - origin[1] - 1
    if structuring_element is None:
        nb = np.zeros_like(k)
    else:
        nb = np.asarray(structuring_element, dtype=np.float32).copy()
    nb[k == 0] = -max_val
    padded = jnp.pad(image, ((0, 0), (0, 0), (pt, pb), (pleft, pright)),
                     constant_values=max_val)
    ero = None
    for i in range(se_h):
        for j in range(se_w):
            cand = padded[:, :, i:i + H, j:j + W] - nb[i, j]
            ero = cand if ero is None else jnp.minimum(ero, cand)
    return ero.astype(image.dtype)


class Erosion:
    """JAX/Pallas analogue of the PyTorch Erosion nn.Module (forward only)."""

    def __init__(self, kernel, structuring_element=None, origin=None,
                 border_type="geodesic", border_value=0.0, max_val=10000.0,
                 engine="unfold"):
        self.kernel = np.asarray(kernel, dtype=np.float32)
        self.structuring_element = structuring_element
        self.origin = origin
        self.border_type = border_type
        self.border_value = border_value
        self.max_val = max_val
        self.engine = engine  # both torch engines compute the same result

    def __call__(self, image, **kwargs):
        return erosion_pallas(image, self.kernel, self.structuring_element,
                              self.origin, self.border_type, self.border_value,
                              self.max_val, **kwargs)


if __name__ == "__main__":
    key = jax.random.PRNGKey(0)
    B, C, H, W = 2, 4, 16, 16
    image = jax.random.uniform(key, (B, C, H, W), dtype=jnp.float32)

    cross = np.array([[0., 1., 0.], [1., 1., 1.], [0., 1., 0.]], np.float32)
    full = np.ones((3, 3), np.float32)
    se = np.array([[0., .1, 0.], [.2, 0., .3], [0., .4, 0.]], np.float32)

    def check(out, ref, tol=1e-6):
        np.testing.assert_allclose(np.asarray(out.astype(jnp.float32)),
                                   np.asarray(ref.astype(jnp.float32)),
                                   rtol=tol, atol=tol)

    # 1) flat cross SE, default (native NCHW) layout, geodesic border.
    out = jax.block_until_ready(Erosion(cross)(image))
    check(out, _reference_erosion(image, cross))
    assert out.shape == (B, C, H, W) and out.dtype == image.dtype

    # 2) full 3x3 SE.
    out = jax.block_until_ready(Erosion(full)(image))
    check(out, _reference_erosion(image, full))

    # 3) non-flat structuring element on the cross support.
    out = jax.block_until_ready(Erosion(cross, structuring_element=se)(image))
    check(out, _reference_erosion(image, cross, structuring_element=se))

    # 4) channels-last layout path (kept for small-W / many-channel inputs).
    out = jax.block_until_ready(Erosion(full)(image, layout="channels_last"))
    check(out, _reference_erosion(image, full))

    # 5) row-tiled native path with halo arrays.
    img2 = jax.random.uniform(jax.random.PRNGKey(1), (1, 2, 32, 128), jnp.float32)
    out = jax.block_until_ready(Erosion(cross)(img2, rows_per_block=16))
    check(out, _reference_erosion(img2, cross))

    # 6) ragged channel block (N % channels_per_block != 0).
    img3 = jax.random.uniform(jax.random.PRNGKey(2), (1, 3, 16, 16), jnp.float32)
    out = jax.block_until_ready(Erosion(full)(img3, channels_per_block=2))
    check(out, _reference_erosion(img3, full))

    # 7) bf16 input with a flat SE (I/O traffic halves; compute stays f32).
    img4 = jax.random.uniform(jax.random.PRNGKey(3), (2, 2, 16, 16),
                              jnp.float32).astype(jnp.bfloat16)
    out = jax.block_until_ready(Erosion(full)(img4))
    assert out.dtype == jnp.bfloat16
    check(out, _reference_erosion(img4.astype(jnp.float32), full), tol=1e-5)

    print("KERNEL_OK")
</pallas_src>

<mosaic_0001>
module attributes {stable_mosaic.version = 11 : i64} {
  func.func @_erosion_nchw_kernel(%arg0: i32, %arg1: i32, %arg2: memref<2x16x16xf32, #tpu.memory_space<vmem>>, %arg3: memref<2x16x16xf32, #tpu.memory_space<vmem>>, %arg4: memref<2x18x145xf32, #tpu.memory_space<vmem>>) attributes {dimension_semantics = [#tpu.dimension_semantics<parallel>, #tpu.dimension_semantics<parallel>], iteration_bounds = array<i64: 4, 1>, scalar_prefetch = 0 : i64, scratch_operands = 1 : i64, tpu.core_type = #tpu.core_type<tc>, window_params = [{transform_indices = @transform_0, window_bounds = array<i64: 2, 16, 16>}, {transform_indices = @transform_1, window_bounds = array<i64: 2, 16, 16>}]} {
    %cst = arith.constant 1.000000e+04 : f32
    %0 = vector.broadcast %cst : f32 to vector<2x18x145xf32>
    %c0 = arith.constant 0 : index
    %c0_0 = arith.constant 0 : index
    %c0_1 = arith.constant 0 : index
    %1 = vector.load %arg4[%c0, %c0_0, %c0_1] : memref<2x18x145xf32, #tpu.memory_space<vmem>>, vector<2x18x145xf32>
    tpu.vector_store %arg4[%c0, %c0_0, %c0_1], %0 {strides = array<i32>} : memref<2x18x145xf32, #tpu.memory_space<vmem>>, vector<2x18x145xf32>,
    %c0_2 = arith.constant 0 : index
    %c0_3 = arith.constant 0 : index
    %c0_4 = arith.constant 0 : index
    %2 = vector.load %arg2[%c0_2, %c0_3, %c0_4] : memref<2x16x16xf32, #tpu.memory_space<vmem>>, vector<2x16x16xf32>
    %c0_5 = arith.constant 0 : index
    %c1 = arith.constant 1 : index
    %c128 = arith.constant 128 : index
    %3 = vector.load %arg4[%c0_5, %c1, %c128] : memref<2x18x145xf32, #tpu.memory_space<vmem>>, vector<2x16x16xf32>
    tpu.vector_store %arg4[%c0_5, %c1, %c128], %2 {strides = array<i32>} : memref<2x18x145xf32, #tpu.memory_space<vmem>>, vector<2x16x16xf32>,
    %c0_6 = arith.constant 0 : index
    %c0_7 = arith.constant 0 : index
    %c128_8 = arith.constant 128 : index
    %4 = vector.load %arg4[%c0_6, %c0_7, %c128_8] : memref<2x18x145xf32, #tpu.memory_space<vmem>>, vector<2x16x16xf32>
    %c0_9 = arith.constant 0 : index
    %c1_10 = arith.constant 1 : index
    %c127 = arith.constant 127 : index
    %5 = vector.load %arg4[%c0_9, %c1_10, %c127] : memref<2x18x145xf32, #tpu.memory_space<vmem>>, vector<2x16x16xf32>
    %6 = arith.minimumf %4, %5 : vector<2x16x16xf32>
    %c0_11 = arith.constant 0 : index
    %c1_12 = arith.constant 1 : index
    %c128_13 = arith.constant 128 : index
    %7 = vector.load %arg4[%c0_11, %c1_12, %c128_13] : memref<2x18x145xf32, #tpu.memory_space<vmem>>, vector<2x16x16xf32>
    %8 = arith.minimumf %6, %7 : vector<2x16x16xf32>
    %c0_14 = arith.constant 0 : index
    %c1_15 = arith.constant 1 : index
    %c129 = arith.constant 129 : index
    %9 = vector.load %arg4[%c0_14, %c1_15, %c129] : memref<2x18x145xf32, #tpu.memory_space<vmem>>, vector<2x16x16xf32>
    %10 = arith.minimumf %8, %9 : vector<2x16x16xf32>
    %c0_16 = arith.constant 0 : index
    %c2 = arith.constant 2 : index
    %c128_17 = arith.constant 128 : index
    %11 = vector.load %arg4[%c0_16, %c2, %c128_17] : memref<2x18x145xf32, #tpu.memory_space<vmem>>, vector<2x16x16xf32>
    %12 = arith.minimumf %10, %11 : vector<2x16x16xf32>
    %c0_18 = arith.constant 0 : index
    %c0_19 = arith.constant 0 : index
    %c0_20 = arith.constant 0 : index
    %13 = vector.load %arg3[%c0_18, %c0_19, %c0_20] : memref<2x16x16xf32, #tpu.memory_space<vmem>>, vector<2x16x16xf32>
    tpu.vector_store %arg3[%c0_18, %c0_19, %c0_20], %12 {strides = array<i32>} : memref<2x16x16xf32, #tpu.memory_space<vmem>>, vector<2x16x16xf32>,
    return
  }
  func.func @transform_0(%arg0: i32, %arg1: i32) -> (i32, i32, i32) {
    %c0_i32 = arith.constant 0 : i32
    %c0_i32_0 = arith.constant 0 : i32
    return %arg0, %arg1, %c0_i32 : i32, i32, i32
  }
  func.func @transform_1(%arg0: i32, %arg1: i32) -> (i32, i32, i32) {
    %c0_i32 = arith.constant 0 : i32
    %c0_i32_0 = arith.constant 0 : i32
    return %arg0, %arg1, %c0_i32 : i32, i32, i32
  }
}

</mosaic_0001>

<llo_original>
// kernel: tpu_custom_call.1
$region0: #{tpu_custom_call.1}
  #allocation0 [shape = 'u32[]', space=smem, size = 0x4, offset = 0x4, fixed_abs, tag = 'smem constant byte address 0x4 - core index']
  #allocation1 [shape = 'u32[144,128]{1,0:T(1,128)}', space=vmem, size = 0x12000, scoped, tag = 'internal scratch']
  #allocation2 [shape = 'f32[2,18,145]{2,1,0:T(8,128)}', space=vmem, size = 0xc000, scoped, tag = 'scratch operand']
  %s0 = inlined_call_operand.hbm [shape: f32[8,16,16], index: 0, kind: input, shape index: {}]
  %s1 = inlined_call_operand.hbm [shape: f32[8,16,16], index: 1, kind: output, shape index: {}]
  %s2 = sld [smem:[#allocation0]]
  $region41: #{tpu_custom_call.1} parent=0
    _
  %s4 = ssub.s32 1, %s2
  %s5 = scalar_select 0, %s4, %s2
  $region1: #{tpu_custom_call.1} parent=0
    #allocation3 [shape = 'u8[32768]{0}', space=vmem, size = 0x8000, scoped, tag = 'input window, operand 0']
    #allocation4 [shape = 's32[2]{0}', space=sflag, size = 0x8, scoped, tag = 'scoped memory for tpu_custom_call.1']
    #allocation5 [shape = 's32[2]{0}', space=sflag, size = 0x8, scoped, tag = 'scoped memory for tpu_custom_call.1']
    #allocation6 [shape = 'u8[32768]{0}', space=vmem, size = 0x8000, scoped, tag = 'output window, operand 0']
    %6 = vsyncpa [#allocation4], 0
    %s7 = scalar_lea.sflag [#allocation4], 1
    %8 = vsyncpa %s7, 0
    %9 = vsyncpa [#allocation5], 0
    %s10 = scalar_lea.sflag [#allocation5], 1
    %11 = vsyncpa %s10, 0
    loop: start=0, step=1, limit=6
    $region2: #{tpu_custom_call.1} parent=1 // loop_pre_header
      _
    $region3: #{tpu_custom_call.1} parent=1 // loop_header
      %s13 = sphi 0, %s17
      %p14 = scmp.ge.s32.totalorder %s13, 6
      %s20 = sphi 0, %s32
      %s21 = sphi 0, %s28
      %s22 = sphi 0, %s20
      %s23 = sphi 0, %s21
      %s24 = sphi 0, %s22
      %s25 = sphi 0, %s23
      %s37 = sphi 0, %s39
      %s40 = sphi 0, %s37
      %s41 = sphi 0, %s40
      %s57 = sphi 0, %s41
      %s65 = sphi 0, %s67
      %s68 = sphi 0, %s65
      %s69 = sphi 0, %s68
      %s85 = sphi 0, %s69
    $region4: #{tpu_custom_call.1} parent=1 // loop_header_branch
      %16 = sbr.rel (%p14) target = $region8
    $region5: #{tpu_custom_call.1} parent=1 // loop_body
      %s18 = ssub.s32 %s13, 1
      %s19 = ssub.s32 %s13, 2
      %s26 = sadd.s32 1, %s21
      %p27 = scmp.ge.s32.totalorder %s26, 1
      %s28 = scalar_select %p27, 0, %s26
      %s29 = sadd.s32 1, %s20
      %s30 = scalar_select %p27, %s29, %s20
      %p31 = scmp.ge.s32.totalorder %s30, 4
      %s32 = scalar_select %p31, 0, %s30
      %s33 = ssub.s32 %s20, %s32
      %s34 = ssub.s32 %s21, %s28
      %s35 = sor.u32 %s33, %s34
      %p36 = scmp.eq.s32.totalorder %s35, 0
      %s38 = sadd.s32 %s37, 1
      %s39 = scalar_select %p36, %s37, %s38
      %p42 = pneg %p36
      %p43 = scmp.eq.s32.totalorder %s13, 3
      %p44 = por %p42, %p43
      %p45 = scmp.ne.s32.totalorder %s37, %s40
      %p46 = scmp.eq.s32.totalorder %s13, 0
      %p47 = por %p45, %p46
      %p48 = scmp.ne.s32.totalorder %s37, %s40
      %p49 = scmp.eq.s32.totalorder %s18, 3
      %p50 = por %p48, %p49
      %p51 = scmp.ne.s32.totalorder %s40, %s41
      %p52 = scmp.eq.s32.totalorder %s18, 0
      %p53 = por %p51, %p52
      %p54 = scmp.ne.s32.totalorder %s40, %s41
      %p55 = scmp.eq.s32.totalorder %s19, 3
      %p56 = por %p54, %p55
      %p58 = scmp.ne.s32.totalorder %s41, %s57
      %p59 = scmp.eq.s32.totalorder %s19, 0
      %p60 = por %p58, %p59
      %s61 = ssub.s32 %s20, %s32
      %s62 = ssub.s32 %s21, %s28
      %s63 = sor.u32 %s61, %s62
      %p64 = scmp.eq.s32.totalorder %s63, 0
      %s66 = sadd.s32 %s65, 1
      %s67 = scalar_select %p64, %s65, %s66
      %p70 = pneg %p64
      %p71 = scmp.eq.s32.totalorder %s13, 3
      %p72 = por %p70, %p71
      %p73 = scmp.ne.s32.totalorder %s65, %s68
      %p74 = scmp.eq.s32.totalorder %s13, 0
      %p75 = por %p73, %p74
      %p76 = scmp.ne.s32.totalorder %s65, %s68
      %p77 = scmp.eq.s32.totalorder %s18, 3
      %p78 = por %p76, %p77
      %p79 = scmp.ne.s32.totalorder %s68, %s69
      %p80 = scmp.eq.s32.totalorder %s18, 0
      %p81 = por %p79, %p80
      %p82 = scmp.ne.s32.totalorder %s68, %s69
      %p83 = scmp.eq.s32.totalorder %s19, 3
      %p84 = por %p82, %p83
      %p86 = scmp.ne.s32.totalorder %s69, %s85
      %p87 = scmp.eq.s32.totalorder %s19, 0
      %p88 = por %p86, %p87
      %p89 = scmp.le.s32.totalorder 1, %s13
      %p90 = scmp.lt.s32.totalorder %s13, 5
      %p91 = pnand %p89, %p90
      %p92 = pneg %p91
      // Predicated region
      $region9: #{tpu_custom_call.1} parent=5 // pred_check
        _
      $region10: #{tpu_custom_call.1} parent=5 // pred_check_branch
        %94 = sbr.rel (%p91) target = $region12
      $region11: #{tpu_custom_call.1} parent=5 // pred_region
        %s95 = ssub.s32 %s13, 1
      $region12: #{tpu_custom_call.1} parent=5 // pred_fallthru
        _
      %p96 = scmp.lt.s32.totalorder %s13, 4
      // Predicated region
      $region13: #{tpu_custom_call.1} parent=5 // pred_check
        %p97 = pneg %p96
      $region14: #{tpu_custom_call.1} parent=5 // pred_check_branch
        %99 = sbr.rel (%p97) target = $region16
      $region15: #{tpu_custom_call.1} parent=5 // pred_region
        // Predicated region
        $region17: #{tpu_custom_call.1} parent=15 // pred_check
          %p100 = pneg %p47
        $region18: #{tpu_custom_call.1} parent=15 // pred_check_branch
          %102 = sbr.rel (%p100) target = $region20
        $region19: #{tpu_custom_call.1} parent=15 // pred_region
          %s103 = sand.u32 %s37, 1
          %s104 = scalar_lea.sflag [#allocation4], %s103
          %s105 = sand.u32 %s37, 1
          %s106 = smul.addr %s105, 32
          %s107 = scalar_lea.vmem [#allocation3], %s106
          %s108 = smul.u32 2, %s20
          %s109 = smul.u32 2, %s21
          %s111 = ssub.s32 512, 512
          %112 = vsyncadd %s104, %s111
          %s113 = smul.addr %s108, 2
          %s114 = sadd.s32 %s109, %s113
          %s115 = smul.addr %s114, 128
          %s116 = scalar_lea.hbm %s0, %s115
          %s117 = sshll.u32 %s107, 4
          %s118 = int_to_ptr.vmem [resolvable:$true] %s117
          %123 = dma.hbm_to_vmem [thread:$0]  %s116, 512, %s118, %s104, 128, 128, 8
        $region20: #{tpu_custom_call.1} parent=15 // pred_fallthru
          _
      $region16: #{tpu_custom_call.1} parent=5 // pred_fallthru
        _
      %p124 = scmp.le.s32.totalorder 1, %s13
      %p125 = scmp.lt.s32.totalorder %s13, 5
      %p126 = pnand %p124, %p125
      %p127 = pneg %p126
      // Predicated region
      $region21: #{tpu_custom_call.1} parent=5 // pred_check
        _
      $region22: #{tpu_custom_call.1} parent=5 // pred_check_branch
        %129 = sbr.rel (%p126) target = $region24
      $region23: #{tpu_custom_call.1} parent=5 // pred_region
        %s130 = ssub.s32 %s13, 1
        %s131 = sand.u32 %s40, 1
        %s132 = scalar_lea.sflag [#allocation4], %s131
        %s133 = sand.u32 %s40, 1
        %s134 = smul.addr %s133, 32
        %s135 = scalar_lea.vmem [#allocation3], %s134
        // Predicated region
        $region25: #{tpu_custom_call.1} parent=23 // pred_check
          %p136 = pneg %p53
        $region26: #{tpu_custom_call.1} parent=23 // pred_check_branch
          %138 = sbr.rel (%p136) target = $region28
        $region27: #{tpu_custom_call.1} parent=23 // pred_region
          %139 = dma.done %s132, 512
        $region28: #{tpu_custom_call.1} parent=23 // pred_fallthru
          _
        %s140 = sand.u32 %s40, 1
        %s141 = scalar_lea.sflag [#allocation4], %s140
        %s142 = sand.u32 %s40, 1
        %s143 = smul.addr %s142, 32
        %s144 = scalar_lea.vmem [#allocation3], %s143
        %p145 = pneg %p53
        %p146 = pneg %p50
        %p147 = pneg %p81
        %p148 = pneg %p78
        %s149 = sand.u32 %s68, 1
        %s150 = scalar_lea.sflag [#allocation5], %s149
        %s151 = sand.u32 %s68, 1
        %s152 = smul.addr %s151, 32
        %s153 = scalar_lea.vmem [#allocation6], %s152
        %s154 = smul.u32 2, %s22
        %s155 = smul.u32 2, %s23
        %s156 = smul.u32 2, %s22
        %s157 = smul.u32 2, %s23
        %158 = vst [vmem:[#allocation2] sm:$0xff] 10000.0
        %vm159 = vcmask 138240
        %160 = vst.msk [vmem:[#allocation2 + $0x8] sm:$0xff] %vm159, 10000.0
        %161 = vst [vmem:[#allocation2 + $0x10] sm:$0xff] 10000.0
        %162 = vst.msk [vmem:[#allocation2 + $0x18] sm:$0xff] %vm159, 10000.0
        %163 = vst [vmem:[#allocation2 + $0x20] sm:$0x3] 10000.0
        %vm164 = vcmask 132096
        %165 = vst.msk [vmem:[#allocation2 + $0x28] sm:$0x3] %vm164, 10000.0
        %166 = vst [vmem:[#allocation2 + $0x30] sm:$0xff] 10000.0
        %167 = vst.msk [vmem:[#allocation2 + $0x38] sm:$0xff] %vm159, 10000.0
        %168 = vst [vmem:[#allocation2 + $0x40] sm:$0xff] 10000.0
        %169 = vst.msk [vmem:[#allocation2 + $0x48] sm:$0xff] %vm159, 10000.0
        %170 = vst [vmem:[#allocation2 + $0x50] sm:$0x3] 10000.0
        %171 = vst.msk [vmem:[#allocation2 + $0x58] sm:$0x3] %vm164, 10000.0
        %v172 = vld [vmem:[%s135] sm:$0xff]
        %v173 = vld [vmem:[%s135 + $0x8] sm:$0xff]
        %v174 = vld [vmem:[%s135 + $0x10] sm:$0xff]
        %v175 = vld [vmem:[%s135 + $0x18] sm:$0xff]
        %vm180 = vcmask 1040384
        %v181 = vrot.slane %v172, 7
        %v182 = vrot.slane %v173, 7
        %v183 = vsel %vm180, %v181, %v182
        %v184 = vrot.slane %v174, 7
        %v185 = vrot.slane %v175, 7
        %v186 = vsel %vm180, %v184, %v185
        %vm193 = vcmask 130049
        %194 = vst.msk [vmem:[#allocation2 + $0x8] sm:$0xfe] %vm193, %v181
        %vm195 = vcmask 130048
        %196 = vst.msk [vmem:[#allocation2 + $0x18] sm:$0xff] %vm195, %v183
        %vm197 = vcmask 122880
        %198 = vst.msk [vmem:[#allocation2 + $0x28] sm:$0x1] %vm197, %v182
        %199 = vst.msk [vmem:[#allocation2 + $0x38] sm:$0xfe] %vm193, %v184
        %200 = vst.msk [vmem:[#allocation2 + $0x48] sm:$0xff] %vm195, %v186
        %201 = vst.msk [vmem:[#allocation2 + $0x58] sm:$0x1] %vm197, %v185
        %v202 = vld [vmem:[#allocation2 + $0x8] sm:$0xff]
        %v203 = vld [vmem:[#allocation2 + $0x18] sm:$0xff]
        %v204 = vld [vmem:[#allocation2 + $0x38] sm:$0xff]
        %v205 = vld [vmem:[#allocation2 + $0x48] sm:$0xff]
        %v206 = vld [vmem:[#allocation2] sm:$0xfe]
        %v207 = vld [vmem:[#allocation2 + $0x8] sm:$0xfe]
        %v208 = vld [vmem:[#allocation2 + $0x10] sm:$0xff]
        %v209 = vld [vmem:[#allocation2 + $0x20] sm:$0x1]
        %v210 = vld [vmem:[#allocation2 + $0x28] sm:$0x1]
        %v211 = vld [vmem:[#allocation2 + $0x30] sm:$0xfe]
        %v212 = vld [vmem:[#allocation2 + $0x38] sm:$0xfe]
        %v213 = vld [vmem:[#allocation2 + $0x40] sm:$0xff]
        %v214 = vld [vmem:[#allocation2 + $0x50] sm:$0x1]
        %v215 = vld [vmem:[#allocation2 + $0x58] sm:$0x1]
        %vm228 = vcmask 1046528
        %v229 = vrot.slane %v206, 1
        %v230 = vrot.slane %v208, 1
        %v231 = vsel %vm228, %v229, %v230
        %v232 = vrot.slane %v207, 1
        %v233 = vrot.slane %v203, 1
        %v234 = vsel %vm228, %v232, %v233
        %v235 = vrot.slane %v209, 1
        %v236 = vsel %vm228, %v230, %v235
        %v237 = vrot.slane %v210, 1
        %v238 = vsel %vm228, %v233, %v237
        %v239 = vrot.slane %v211, 1
        %v240 = vrot.slane %v213, 1
        %v241 = vsel %vm228, %v239, %v240
        %v242 = vrot.slane %v212, 1
        %v243 = vrot.slane %v205, 1
        %v244 = vsel %vm228, %v242, %v243
        %v245 = vrot.slane %v214, 1
        %v246 = vsel %vm228, %v240, %v245
        %v247 = vrot.slane %v215, 1
        %v248 = vsel %vm228, %v243, %v247
        %249 = vrot.lane.b32.xlu0 %v231, 1
        %v250 = vpop.permute.xlu0 %249
        %251 = vrot.lane.b32.xlu0 %v234, 1
        %v252 = vpop.permute.xlu0 %251
        %253 = vrot.lane.b32.xlu0 %v236, 1
        %v254 = vpop.permute.xlu0 %253
        %255 = vrot.lane.b32.xlu0 %v238, 1
        %v256 = vpop.permute.xlu0 %255
        %257 = vrot.lane.b32.xlu0 %v241, 1
        %v258 = vpop.permute.xlu0 %257
        %259 = vrot.lane.b32.xlu0 %v244, 1
        %v260 = vpop.permute.xlu0 %259
        %261 = vrot.lane.b32.xlu0 %v246, 1
        %v262 = vpop.permute.xlu0 %261
        %263 = vrot.lane.b32.xlu0 %v248, 1
        %v264 = vpop.permute.xlu0 %263
        %vm265 = vcmask 7168
        %v266 = vsel %vm265, %v250, %v252
        %v267 = vsel %vm265, %v254, %v256
        %v268 = vsel %vm265, %v258, %v260
        %v269 = vsel %vm265, %v262, %v264
        %v274 = vmin.f32 %v202, %v266
        %v275 = vmin.f32 %v203, %v267
        %v276 = vmin.f32 %v204, %v268
        %v277 = vmin.f32 %v205, %v269
        %v282 = vmin.f32 %v274, %v234
        %v283 = vmin.f32 %v275, %v238
        %v284 = vmin.f32 %v276, %v244
        %v285 = vmin.f32 %v277, %v248
        %286 = vrot.lane.b32.xlu0 %v234, 127
        %v287 = vpop.permute.xlu0 %286
        %288 = vrot.lane.b32.xlu0 %v238, 127
        %v289 = vpop.permute.xlu0 %288
        %290 = vrot.lane.b32.xlu0 %v244, 127
        %v291 = vpop.permute.xlu0 %290
        %292 = vrot.lane.b32.xlu0 %v248, 127
        %v293 = vpop.permute.xlu0 %292
        %v298 = vmin.f32 %v282, %v287
        %v299 = vmin.f32 %v283, %v289
        %v300 = vmin.f32 %v284, %v291
        %v301 = vmin.f32 %v285, %v293
        %v302 = vld [vmem:[#allocation2 + $0x8] sm:$0xfc]
        %v303 = vld [vmem:[#allocation2 + $0x28] sm:$0x3]
        %v304 = vld [vmem:[#allocation2 + $0x38] sm:$0xfc]
        %v305 = vld [vmem:[#allocation2 + $0x58] sm:$0x3]
        %vm310 = vcmask 1045504
        %v311 = vrot.slane %v302, 2
        %v312 = vrot.slane %v203, 2
        %v313 = vsel %vm310, %v311, %v312
        %v314 = vrot.slane %v303, 2
        %v315 = vsel %vm310, %v312, %v314
        %v316 = vrot.slane %v304, 2
        %v317 = vrot.slane %v205, 2
        %v318 = vsel %vm310, %v316, %v317
        %v319 = vrot.slane %v305, 2
        %v320 = vsel %vm310, %v317, %v319
        %v325 = vmin.f32 %v298, %v313
        %v326 = vmin.f32 %v299, %v315
        %v327 = vmin.f32 %v300, %v318
        %v328 = vmin.f32 %v301, %v320
        %329 = vst.msk [vmem:[%s153] sm:$0xff] %vm195, %v325
        %330 = vst.msk [vmem:[%s153 + $0x8] sm:$0xff] %vm195, %v326
        %331 = vst.msk [vmem:[%s153 + $0x10] sm:$0xff] %vm195, %v327
        %332 = vst.msk [vmem:[%s153 + $0x18] sm:$0xff] %vm195, %v328
        %s333 = sand.u32 %s68, 1
        %s334 = scalar_lea.sflag [#allocation5], %s333
        %s335 = sand.u32 %s68, 1
        %s336 = smul.addr %s335, 32
        %s337 = scalar_lea.vmem [#allocation6], %s336
        // Predicated region
        $region29: #{tpu_custom_call.1} parent=23 // pred_check
          %p338 = pneg %p78
        $region30: #{tpu_custom_call.1} parent=23 // pred_check_branch
          %340 = sbr.rel (%p338) target = $region32
        $region31: #{tpu_custom_call.1} parent=23 // pred_region
          %s341 = smul.u32 2, %s22
          %s342 = smul.u32 2, %s23
          %s344 = ssub.s32 512, 512
          %345 = vsyncadd %s334, %s344
          %s346 = smul.addr %s341, 2
          %s347 = sadd.s32 %s342, %s346
          %s348 = smul.addr %s347, 128
          %s349 = scalar_lea.hbm %s1, %s348
          %s350 = sshll.u32 %s337, 4
          %s351 = int_to_ptr.vmem [resolvable:$true] %s350
          %356 = dma.vmem_to_hbm [thread:$0]  %s351, 512, %s349, %s334, 128, 128, 8
        $region32: #{tpu_custom_call.1} parent=23 // pred_fallthru
          _
      $region24: #{tpu_custom_call.1} parent=5 // pred_fallthru
        _
      %p357 = scmp.le.s32.totalorder 2, %s13
      // Predicated region
      $region33: #{tpu_custom_call.1} parent=5 // pred_check
        %p358 = pneg %p357
      $region34: #{tpu_custom_call.1} parent=5 // pred_check_branch
        %360 = sbr.rel (%p358) target = $region36
      $region35: #{tpu_custom_call.1} parent=5 // pred_region
        %s361 = ssub.s32 %s13, 2
        // Predicated region
        $region37: #{tpu_custom_call.1} parent=35 // pred_check
          %p362 = pneg %p84
        $region38: #{tpu_custom_call.1} parent=35 // pred_check_branch
          %364 = sbr.rel (%p362) target = $region40
        $region39: #{tpu_custom_call.1} parent=35 // pred_region
          %s365 = sand.u32 %s69, 1
          %s366 = scalar_lea.sflag [#allocation5], %s365
          %s367 = sand.u32 %s69, 1
          %s368 = smul.addr %s367, 32
          %s369 = scalar_lea.vmem [#allocation6], %s368
          %370 = dma.done %s366, 512
        $region40: #{tpu_custom_call.1} parent=35 // pred_fallthru
          _
      $region36: #{tpu_custom_call.1} parent=5 // pred_fallthru
        _
    $region6: #{tpu_custom_call.1} parent=1 // loop_footer
      %s17 = sadd.s32 1, %s13
    $region7: #{tpu_custom_call.1} parent=1 // loop_footer_branch
      %12 = sbr.rel target = $region3
    $region8: #{tpu_custom_call.1} parent=1 // loop_exit
      _
    %371 = vsyncpa [#allocation4], 1
    %s372 = scalar_lea.sflag [#allocation4], 1
    %373 = vsyncpa %s372, 1
    %374 = vsyncpa [#allocation5], 1
    %s375 = scalar_lea.sflag [#allocation5], 1
    %376 = vsyncpa %s375, 1

</llo_original>
